<compile_context>
chip_gen: v7x
topology: tpu7x:2x2x1
jax: 0.10.0
libtpu: 0.0.40
codegen_flags: <defaults>
</compile_context>

<pallas_src>
import math

import jax
import jax.numpy as jnp
from jax.experimental import pallas as pl
from jax.experimental.pallas import tpu as pltpu


def _flatten_copy_kernel(x_ref, o_ref):
    # Straight copy of the current (TN, TF) tile; lane-dense output means
    # unmasked vector stores (matters most on v5e's single vst slot).
    o_ref[...] = x_ref[...]


def _sublane_unit(dtype):
    # Sublane multiple for the (8,128) tiling rule scales with packing:
    # f32 -> 8, bf16/f16 -> 16, int8/fp8 -> 32.
    itemsize = jnp.dtype(dtype).itemsize
    return max(8, 32 // max(1, itemsize))


def _largest_divisor_tile(dim, unit, cap):
    """Largest multiple of `unit` that evenly divides `dim` and is <= cap.

    Falls back to the full dimension (which is always a legal block size)
    when `dim` is small or not a multiple of `unit`.
    """
    if dim <= cap:
        return dim
    if dim % unit:
        return dim
    t = (cap // unit) * unit
    while t >= unit:
        if dim % t == 0:
            return t
        t -= unit
    return dim


def pallas_flatten(x, start_dim=1, end_dim=-1, materialize=False):
    """torch.flatten(x, start_dim, end_dim) semantics."""
    ndim = x.ndim
    sd = start_dim % ndim
    ed = end_dim % ndim
    assert sd <= ed, "start_dim must be <= end_dim"

    new_shape = (
        x.shape[:sd]
        + (int(math.prod(x.shape[sd : ed + 1])),)
        + x.shape[ed + 1 :]
    )

    if not materialize:
        # Fast path (default): flatten of a contiguous array is a pure view
        # change — zero HBM traffic, zero kernel-launch overhead.
        return jnp.reshape(x, new_shape)

    flat = jnp.reshape(x, new_shape)
    if flat.ndim < 2 or flat.size == 0:
        return flat

    # Collapse to a 2-D (N, F) slab and run a tiled Pallas copy over it.
    N = int(math.prod(flat.shape[:-1]))
    F = flat.shape[-1]
    slab = jnp.reshape(flat, (N, F))

    itemsize = jnp.dtype(slab.dtype).itemsize
    sub_unit = _sublane_unit(slab.dtype)

    # Lane tile: multiple of 128, up to 2048 lanes (>=512 keeps us near the
    # ~85% HBM-roofline regime for tiled copies).
    tf = _largest_divisor_tile(F, 128, 2048)
    # Row tile: keep each tile <= ~4 MiB so double-buffered in+out
    # (4x tile bytes) stays under the v7x scoped-VMEM budget.
    max_rows = max(sub_unit, (4 * 1024 * 1024) // max(1, tf * itemsize))
    tn = _largest_divisor_tile(N, sub_unit, max_rows)

    grid = (N // tn, F // tf)

    out = pl.pallas_call(
        _flatten_copy_kernel,
        out_shape=jax.ShapeDtypeStruct((N, F), slab.dtype),
        grid_spec=pltpu.PrefetchScalarGridSpec(
            num_scalar_prefetch=0,
            grid=grid,
            in_specs=[pl.BlockSpec((tn, tf), lambda i, j: (i, j))],
            out_specs=pl.BlockSpec((tn, tf), lambda i, j: (i, j)),
        ),
        compiler_params=pltpu.CompilerParams(
            # Pure copy, every tile independent: shard across both TCs on v7x.
            dimension_semantics=("parallel", "parallel"),
            vmem_limit_bytes=32 * 1024 * 1024,
        ),
    )(slab)
    return jnp.reshape(out, new_shape)


if __name__ == "__main__":
    key = jax.random.PRNGKey(0)
    # Small NCHW input consistent with typical conv feature maps.
    x = jax.random.normal(key, (2, 4, 16, 16), dtype=jnp.float32)

    # Reference: row-major flatten of dims 1..-1.
    ref = jnp.reshape(x, (x.shape[0], -1))

    # Default fast path: metadata-only reshape (no kernel, zero HBM traffic).
    y_view = jax.block_until_ready(pallas_flatten(x, start_dim=1, end_dim=-1))
    assert y_view.shape == (2, 4 * 16 * 16), y_view.shape
    assert y_view.dtype == x.dtype
    assert bool(jnp.array_equal(y_view, ref))

    # Materializing path: exercise the tiled Pallas copy kernel once.
    y = pallas_flatten(x, start_dim=1, end_dim=-1, materialize=True)
    y = jax.block_until_ready(y)
    assert y.shape == (2, 4 * 16 * 16), y.shape
    assert y.dtype == x.dtype
    assert bool(jnp.array_equal(y, ref))

    print("KERNEL_OK")
</pallas_src>

<mosaic_0001>
module attributes {stable_mosaic.version = 11 : i64} {
  func.func @_flatten_copy_kernel(%arg0: i32, %arg1: i32, %arg2: memref<2x1024xf32, #tpu.memory_space<vmem>>, %arg3: memref<2x1024xf32, #tpu.memory_space<vmem>>) attributes {dimension_semantics = [#tpu.dimension_semantics<parallel>, #tpu.dimension_semantics<parallel>], iteration_bounds = array<i64: 1, 1>, scalar_prefetch = 0 : i64, scratch_operands = 0 : i64, tpu.core_type = #tpu.core_type<tc>, window_params = [{transform_indices = @transform_0, window_bounds = array<i64: 2, 1024>}, {transform_indices = @transform_1, window_bounds = array<i64: 2, 1024>}]} {
    %c0 = arith.constant 0 : index
    %c0_0 = arith.constant 0 : index
    %0 = vector.load %arg2[%c0, %c0_0] : memref<2x1024xf32, #tpu.memory_space<vmem>>, vector<2x1024xf32>
    %c0_1 = arith.constant 0 : index
    %c0_2 = arith.constant 0 : index
    %1 = vector.load %arg3[%c0_1, %c0_2] : memref<2x1024xf32, #tpu.memory_space<vmem>>, vector<2x1024xf32>
    tpu.vector_store %arg3[%c0_1, %c0_2], %0 {strides = array<i32>} : memref<2x1024xf32, #tpu.memory_space<vmem>>, vector<2x1024xf32>,
    return
  }
  func.func @transform_0(%arg0: i32, %arg1: i32) -> (i32, i32) {
    %c0_i32 = arith.constant 0 : i32
    return %arg0, %arg1 : i32, i32
  }
  func.func @transform_1(%arg0: i32, %arg1: i32) -> (i32, i32) {
    %c0_i32 = arith.constant 0 : i32
    return %arg0, %arg1 : i32, i32
  }
}

</mosaic_0001>

<llo_original>
// kernel: tpu_custom_call.1
$region0: #{tpu_custom_call.1}
  #allocation0 [shape = 'u32[]', space=smem, size = 0x4, offset = 0x4, fixed_abs, tag = 'smem constant byte address 0x4 - core index']
  #allocation1 [shape = 'u32[144,128]{1,0:T(1,128)}', space=vmem, size = 0x12000, scoped, tag = 'internal scratch']
  %s0 = inlined_call_operand.hbm [shape: f32[2,1024], index: 0, kind: input, shape index: {}]
  %s1 = inlined_call_operand.hbm [shape: f32[2,1024], index: 1, kind: output, shape index: {}]
  %s2 = sld [smem:[#allocation0]]
  $region18: #{tpu_custom_call.1} parent=0
    _
  %s4 = ssub.s32 1, %s2
  %s5 = scalar_select 0, %s4, %s2
  $region1: #{tpu_custom_call.1} parent=0
    #allocation2 [shape = 'u8[8192]{0}', space=vmem, size = 0x2000, scoped, tag = 'input window, operand 0, single buffered']
    #allocation3 [shape = 's32[1]{0}', space=sflag, size = 0x4, scoped, tag = 'scoped memory for tpu_custom_call.1']
    #allocation4 [shape = 's32[1]{0}', space=sflag, size = 0x4, scoped, tag = 'scoped memory for tpu_custom_call.1']
    #allocation5 [shape = 'u8[8192]{0}', space=vmem, size = 0x2000, scoped, tag = 'output window, operand 0, single buffered']
    %6 = vsyncpa [#allocation3], 0
    %7 = vsyncpa [#allocation4], 0
    // Predicated region
    $region2: #{tpu_custom_call.1} parent=1 // pred_check
      _
    $region3: #{tpu_custom_call.1} parent=1 // pred_check_branch
      %9 = sbr.rel (0) target = $region5
    $region4: #{tpu_custom_call.1} parent=1 // pred_region
      %s11 = ssub.s32 256, 256
      %12 = vsyncadd [#allocation3], %s11
      %s14 = sshll.u32 [#allocation2], 4
      %s15 = int_to_ptr.vmem [resolvable:$true] %s14
      %17 = dma.hbm_to_vmem [thread:$0]  %s0, 256, %s15, [#allocation3]
    $region5: #{tpu_custom_call.1} parent=1 // pred_fallthru
      _
    // Predicated region
    $region6: #{tpu_custom_call.1} parent=1 // pred_check
      _
    $region7: #{tpu_custom_call.1} parent=1 // pred_check_branch
      %19 = sbr.rel (0) target = $region9
    $region8: #{tpu_custom_call.1} parent=1 // pred_region
      %20 = dma.done [#allocation3], 256
    $region9: #{tpu_custom_call.1} parent=1 // pred_fallthru
      _
    %v21 = vld [vmem:[#allocation2] sm:$0xff]
    %v22 = vld [vmem:[#allocation2 + $0x8] sm:$0xff]
    %23 = vst [vmem:[#allocation5] sm:$0xff] %v21
    %24 = vst [vmem:[#allocation5 + $0x8] sm:$0xff] %v22
    // Predicated region
    $region10: #{tpu_custom_call.1} parent=1 // pred_check
      _
    $region11: #{tpu_custom_call.1} parent=1 // pred_check_branch
      %26 = sbr.rel (0) target = $region13
    $region12: #{tpu_custom_call.1} parent=1 // pred_region
      %s28 = ssub.s32 256, 256
      %29 = vsyncadd [#allocation4], %s28
      %s31 = sshll.u32 [#allocation5], 4
      %s32 = int_to_ptr.vmem [resolvable:$true] %s31
      %34 = dma.vmem_to_hbm [thread:$0]  %s32, 256, %s1, [#allocation4]
    $region13: #{tpu_custom_call.1} parent=1 // pred_fallthru
      _
    // Predicated region
    $region14: #{tpu_custom_call.1} parent=1 // pred_check
      _
    $region15: #{tpu_custom_call.1} parent=1 // pred_check_branch
      %36 = sbr.rel (0) target = $region17
    $region16: #{tpu_custom_call.1} parent=1 // pred_region
      %37 = dma.done [#allocation4], 256
    $region17: #{tpu_custom_call.1} parent=1 // pred_fallthru
      _
    %38 = vsyncpa [#allocation3], 1
    %39 = vsyncpa [#allocation4], 1

</llo_original>
